<compile_context>
chip_gen: v5e
topology: v5e:2x2
jax: 0.10.0
libtpu: 0.0.40
codegen_flags: <defaults>
</compile_context>

<pallas_src>
import math

import jax
import jax.numpy as jnp
from jax import lax
from jax.experimental import pallas as pl
from jax.experimental.pallas import tpu as pltpu

# ---- model hyper-parameters (small, consistent with the module) ----
L = 8          # sequence length
B = 2          # batch size
D = 32         # d_model
NHEAD = 4      # number of attention heads
HD = D // NHEAD            # head dim
FF = 64        # dim_feedforward
EPS = 1e-5     # layer_norm_eps
SCALE = 1.0 / math.sqrt(HD)

R = L * B                  # rows of the flattened (seq*batch, d_model) slab
NR = NHEAD * R             # rows of the head-stacked attention slab

# power-of-two index math (shifts/ands only inside the kernel)
assert R & (R - 1) == 0 and B & (B - 1) == 0
LOG_R = R.bit_length() - 1
B_MASK = B - 1

# ---- packed parameter-bank layout (single HBM->VMEM DMA) ----
# All offsets are multiples of 8 on the sublane axis and 0 on the lane axis, so every
# in-kernel slice is a cheap aligned tile load.
BANK_LANES = 128
ROW_WQKV = 0                 # rows [0,   D)      cols [0, 3D)   fused in-proj W^T
ROW_WO   = D                 # rows [D,  2D)      cols [0,  D)   out-proj W^T
ROW_W1   = 2 * D             # rows [2D, 3D)      cols [0, FF)   linear1 W^T
ROW_W2   = 3 * D             # rows [3D, 3D+FF)   cols [0,  D)   linear2 W^T
ROW_VEC  = 3 * D + FF        # 8 vectors, each on its own 8-row-aligned row
N_VECS   = 8                 # bqkv, bo, g1, be1, b1, b2, g2, be2
BANK_ROWS = ROW_VEC + 8 * N_VECS   # 224


def _encoder_layer_kernel(x_ref, bank_ref, o_ref):
    x = x_ref[...]                                                      # (R, D)

    # ---- unpack the parameter bank (aligned static slices, no relayout) ----
    wqkv = bank_ref[ROW_WQKV:ROW_WQKV + D, 0:3 * D]                     # (D, 3D)
    wo   = bank_ref[ROW_WO:ROW_WO + D, 0:D]                             # (D, D)
    w1   = bank_ref[ROW_W1:ROW_W1 + D, 0:FF]                            # (D, FF)
    w2   = bank_ref[ROW_W2:ROW_W2 + FF, 0:D]                            # (FF, D)

    def vec(i, n):
        r = ROW_VEC + 8 * i
        return bank_ref[r:r + 1, 0:n]                                   # (1, n)

    bqkv = vec(0, 3 * D)
    bo   = vec(1, D)
    g1   = vec(2, D)
    be1  = vec(3, D)
    b1   = vec(4, FF)
    b2   = vec(5, D)
    g2   = vec(6, D)
    be2  = vec(7, D)

    # ---- fused QKV in-projection: one MXU push instead of three ----
    qkv = jnp.dot(x, wqkv, preferred_element_type=jnp.float32) + bqkv   # (R, 3D)
    q = qkv[:, :D] * SCALE
    k = qkv[:, D:2 * D]
    v = qkv[:, 2 * D:]

    # ---- block-diagonal multi-head attention: single QK^T / PV matmul pair ----
    # head-major stacking: row i = h*R + r holds head h of flattened token-row r
    q2 = jnp.concatenate([q[:, h * HD:(h + 1) * HD] for h in range(NHEAD)], axis=0)
    k2 = jnp.concatenate([k[:, h * HD:(h + 1) * HD] for h in range(NHEAD)], axis=0)
    v2 = jnp.concatenate([v[:, h * HD:(h + 1) * HD] for h in range(NHEAD)], axis=0)

    s = lax.dot_general(q2, k2, (((1,), (1,)), ((), ())),
                        preferred_element_type=jnp.float32)             # (NR, NR)

    # mask: attend only within the same head AND the same batch element.
    # x rows are the row-major flatten of (L, B): r = l*B + b  ->  batch id = i & (B-1),
    # head id = i >> log2(R).
    ri = lax.broadcasted_iota(jnp.int32, (NR, NR), 0)
    ci = lax.broadcasted_iota(jnp.int32, (NR, NR), 1)
    valid = ((ri >> LOG_R) == (ci >> LOG_R)) & ((ri & B_MASK) == (ci & B_MASK))
    s = jnp.where(valid, s, -1e30)

    # numerically stable softmax; divide on the (otherwise idle) EUP slot
    s = s - jnp.max(s, axis=-1, keepdims=True)
    p = jnp.exp(s)
    p = p * pl.reciprocal(jnp.sum(p, axis=-1, keepdims=True), approx=True)

    ctx2 = jnp.dot(p, v2, preferred_element_type=jnp.float32)           # (NR, HD)
    # un-stack heads back to (R, D), entirely in registers (no VMEM scratch round-trip)
    ctx = jnp.concatenate([ctx2[h * R:(h + 1) * R, :] for h in range(NHEAD)], axis=1)

    attn = jnp.dot(ctx, wo, preferred_element_type=jnp.float32) + bo    # (R, D)

    # ---- residual + LayerNorm 1 (post-norm) ----
    y = x + attn
    mu = jnp.mean(y, axis=-1, keepdims=True)
    var = jnp.mean((y - mu) * (y - mu), axis=-1, keepdims=True)
    y = (y - mu) * lax.rsqrt(var + EPS) * g1 + be1

    # ---- feed-forward (ReLU) ----
    h1 = jnp.dot(y, w1, preferred_element_type=jnp.float32) + b1
    h1 = jnp.maximum(h1, 0.0)
    ff = jnp.dot(h1, w2, preferred_element_type=jnp.float32) + b2

    # ---- residual + LayerNorm 2 ----
    z = y + ff
    mu2 = jnp.mean(z, axis=-1, keepdims=True)
    var2 = jnp.mean((z - mu2) * (z - mu2), axis=-1, keepdims=True)
    o_ref[...] = (z - mu2) * lax.rsqrt(var2 + EPS) * g2 + be2


def pack_params(params):
    """One-time host-side packing of all weights/biases into a single lane-dense bank."""
    bank = jnp.zeros((BANK_ROWS, BANK_LANES), jnp.float32)
    bank = bank.at[ROW_WQKV:ROW_WQKV + D, 0:3 * D].set(params["w_qkv"])
    bank = bank.at[ROW_WO:ROW_WO + D, 0:D].set(params["wo_t"])
    bank = bank.at[ROW_W1:ROW_W1 + D, 0:FF].set(params["w1_t"])
    bank = bank.at[ROW_W2:ROW_W2 + FF, 0:D].set(params["w2_t"])
    vecs = [
        (params["b_qkv"], 3 * D), (params["bo"], D),
        (params["g1"], D), (params["be1"], D),
        (params["b1"], FF), (params["b2"], D),
        (params["g2"], D), (params["be2"], D),
    ]
    for i, (vec, n) in enumerate(vecs):
        bank = bank.at[ROW_VEC + 8 * i, 0:n].set(vec.reshape(-1))
    return bank


def transformer_encoder_layer(x_lbd, bank):
    """x_lbd: (L, B, D) float32; bank: packed (BANK_ROWS, 128) params -> (L, B, D)."""
    # (L, B, D) -> (L*B, D) is a free contiguous reshape (no transpose, no HBM copy).
    x2d = x_lbd.reshape(R, D)

    flops = (2 * R * D * 3 * D              # fused QKV projection
             + 2 * 2 * NR * NR * HD          # block-diagonal QK^T + PV
             + 2 * R * D * D                 # out-projection
             + 2 * 2 * R * D * FF)           # feed-forward (both linears)
    transcendentals = NR * NR + NR + 2 * R   # exp + recip + rsqrt
    bytes_accessed = 4 * (2 * R * D + BANK_ROWS * BANK_LANES)

    out2d = pl.pallas_call(
        _encoder_layer_kernel,
        out_shape=jax.ShapeDtypeStruct((R, D), jnp.float32),
        grid_spec=pltpu.PrefetchScalarGridSpec(
            num_scalar_prefetch=0,
            grid=(1,),                        # whole batch in one grid step
            in_specs=[
                pl.BlockSpec((R, D), lambda i: (0, 0)),                  # activations
                pl.BlockSpec((BANK_ROWS, BANK_LANES), lambda i: (0, 0)),  # param bank
            ],
            out_specs=pl.BlockSpec((R, D), lambda i: (0, 0)),
        ),
        compiler_params=pltpu.CompilerParams(
            dimension_semantics=("arbitrary",)),
        cost_estimate=pl.CostEstimate(flops=flops,
                                      transcendentals=transcendentals,
                                      bytes_accessed=bytes_accessed),
    )(x2d, bank)
    return out2d.reshape(L, B, D)


# ---------------- pure-JAX reference (for self-check) ----------------
def _reference(x, params):
    # x: (L, B, D)
    qkv = x @ params["w_qkv"] + params["b_qkv"]                      # (L, B, 3D)
    q, k, v = jnp.split(qkv, 3, axis=-1)
    qh = q.reshape(L, B, NHEAD, HD)
    kh = k.reshape(L, B, NHEAD, HD)
    vh = v.reshape(L, B, NHEAD, HD)
    s = jnp.einsum("qbhd,kbhd->bhqk", qh * SCALE, kh)
    p = jax.nn.softmax(s, axis=-1)
    ctx = jnp.einsum("bhqk,kbhd->qbhd", p, vh).reshape(L, B, D)
    attn = ctx @ params["wo_t"] + params["bo"]

    def ln(t, g, b):
        mu = jnp.mean(t, axis=-1, keepdims=True)
        var = jnp.mean((t - mu) ** 2, axis=-1, keepdims=True)
        return (t - mu) / jnp.sqrt(var + EPS) * g + b

    y = ln(x + attn, params["g1"], params["be1"])
    ff = jnp.maximum(y @ params["w1_t"] + params["b1"], 0.0) @ params["w2_t"] + params["b2"]
    return ln(y + ff, params["g2"], params["be2"])


def _init_params(key):
    ks = jax.random.split(key, 8)
    # PyTorch MultiheadAttention: in_proj_weight (3D, D); we fuse and store W^T -> (D, 3D)
    in_proj_w = jax.random.normal(ks[0], (3 * D, D), jnp.float32) * 0.05
    in_proj_b = jax.random.normal(ks[1], (3 * D,), jnp.float32) * 0.05
    wo = jax.random.normal(ks[2], (D, D), jnp.float32) * 0.05        # out_proj.weight
    bo = jax.random.normal(ks[3], (D,), jnp.float32) * 0.05
    w1 = jax.random.normal(ks[4], (FF, D), jnp.float32) * 0.05       # linear1.weight
    b1 = jax.random.normal(ks[5], (FF,), jnp.float32) * 0.05
    w2 = jax.random.normal(ks[6], (D, FF), jnp.float32) * 0.05       # linear2.weight
    b2 = jax.random.normal(ks[7], (D,), jnp.float32) * 0.05
    return {
        "w_qkv": in_proj_w.T,                       # (D, 3D): columns = [q | k | v]
        "b_qkv": in_proj_b.reshape(1, 3 * D),
        "wo_t": wo.T, "bo": bo.reshape(1, D),
        "g1": jnp.ones((1, D), jnp.float32), "be1": jnp.zeros((1, D), jnp.float32),
        "w1_t": w1.T, "b1": b1.reshape(1, FF),
        "w2_t": w2.T, "b2": b2.reshape(1, D),
        "g2": jnp.ones((1, D), jnp.float32), "be2": jnp.zeros((1, D), jnp.float32),
    }


if __name__ == "__main__":
    key = jax.random.PRNGKey(0)
    k_x, k_p = jax.random.split(key)
    x = jax.random.normal(k_x, (L, B, D), jnp.float32)               # (seq, batch, d_model)
    params = _init_params(k_p)
    bank = pack_params(params)                                        # one-time packing

    out = transformer_encoder_layer(x, bank)
    out = jax.block_until_ready(out)

    ref = _reference(x, params)
    assert out.shape == (L, B, D)
    # tolerance slightly relaxed for the EUP approximate reciprocal in the softmax denominator
    assert jnp.allclose(out, ref, atol=1e-2, rtol=1e-2), "mismatch vs pure-JAX reference"
    print("KERNEL_OK")
</pallas_src>

<mosaic_0001>
module attributes {stable_mosaic.version = 11 : i64} {
  func.func @_encoder_layer_kernel(%arg0: i32, %arg1: memref<16x32xf32, #tpu.memory_space<vmem>>, %arg2: memref<224x128xf32, #tpu.memory_space<vmem>>, %arg3: memref<16x32xf32, #tpu.memory_space<vmem>>) attributes {dimension_semantics = [#tpu.dimension_semantics<arbitrary>], iteration_bounds = array<i64: 1>, scalar_prefetch = 0 : i64, scratch_operands = 0 : i64, tpu.core_type = #tpu.core_type<tc>, window_params = [{pipeline_mode = #tpu.pipeline_mode<synchronous>, transform_indices = @transform_0, window_bounds = array<i64: 16, 32>}, {pipeline_mode = #tpu.pipeline_mode<synchronous>, transform_indices = @transform_1, window_bounds = array<i64: 224, 128>}, {pipeline_mode = #tpu.pipeline_mode<synchronous>, transform_indices = @transform_2, window_bounds = array<i64: 16, 32>}]} {
    %c0 = arith.constant 0 : index
    %c0_0 = arith.constant 0 : index
    %0 = vector.load %arg1[%c0, %c0_0] : memref<16x32xf32, #tpu.memory_space<vmem>>, vector<16x32xf32>
    %c0_1 = arith.constant 0 : index
    %c0_2 = arith.constant 0 : index
    %1 = vector.load %arg2[%c0_1, %c0_2] : memref<224x128xf32, #tpu.memory_space<vmem>>, vector<32x96xf32>
    %c32 = arith.constant 32 : index
    %c0_3 = arith.constant 0 : index
    %2 = vector.load %arg2[%c32, %c0_3] : memref<224x128xf32, #tpu.memory_space<vmem>>, vector<32x32xf32>
    %c64 = arith.constant 64 : index
    %c0_4 = arith.constant 0 : index
    %3 = vector.load %arg2[%c64, %c0_4] : memref<224x128xf32, #tpu.memory_space<vmem>>, vector<32x64xf32>
    %c96 = arith.constant 96 : index
    %c0_5 = arith.constant 0 : index
    %4 = vector.load %arg2[%c96, %c0_5] : memref<224x128xf32, #tpu.memory_space<vmem>>, vector<64x32xf32>
    %c160 = arith.constant 160 : index
    %c0_6 = arith.constant 0 : index
    %5 = vector.load %arg2[%c160, %c0_6] : memref<224x128xf32, #tpu.memory_space<vmem>>, vector<1x96xf32>
    %c168 = arith.constant 168 : index
    %c0_7 = arith.constant 0 : index
    %6 = vector.load %arg2[%c168, %c0_7] : memref<224x128xf32, #tpu.memory_space<vmem>>, vector<1x32xf32>
    %c176 = arith.constant 176 : index
    %c0_8 = arith.constant 0 : index
    %7 = vector.load %arg2[%c176, %c0_8] : memref<224x128xf32, #tpu.memory_space<vmem>>, vector<1x32xf32>
    %c184 = arith.constant 184 : index
    %c0_9 = arith.constant 0 : index
    %8 = vector.load %arg2[%c184, %c0_9] : memref<224x128xf32, #tpu.memory_space<vmem>>, vector<1x32xf32>
    %c192 = arith.constant 192 : index
    %c0_10 = arith.constant 0 : index
    %9 = vector.load %arg2[%c192, %c0_10] : memref<224x128xf32, #tpu.memory_space<vmem>>, vector<1x64xf32>
    %c200 = arith.constant 200 : index
    %c0_11 = arith.constant 0 : index
    %10 = vector.load %arg2[%c200, %c0_11] : memref<224x128xf32, #tpu.memory_space<vmem>>, vector<1x32xf32>
    %c208 = arith.constant 208 : index
    %c0_12 = arith.constant 0 : index
    %11 = vector.load %arg2[%c208, %c0_12] : memref<224x128xf32, #tpu.memory_space<vmem>>, vector<1x32xf32>
    %c216 = arith.constant 216 : index
    %c0_13 = arith.constant 0 : index
    %12 = vector.load %arg2[%c216, %c0_13] : memref<224x128xf32, #tpu.memory_space<vmem>>, vector<1x32xf32>
    %cst = arith.constant dense<0.000000e+00> : vector<16x96xf32>
    %13 = tpu.matmul %0, %1, %cst {dimension_numbers = #tpu.dot_dimension_numbers<[1], [0], [0], [1], [0, 0, 1, 1], [], []>} : vector<16x32xf32>, vector<32x96xf32>, vector<16x96xf32> -> vector<16x96xf32>
    %14 = vector.broadcast %5 : vector<1x96xf32> to vector<16x96xf32>
    %15 = arith.addf %13, %14 : vector<16x96xf32>
    %16 = vector.extract_strided_slice %15 {offsets = [0, 0], sizes = [16, 32], strides = [1, 1]} : vector<16x96xf32> to vector<16x32xf32>
    %cst_14 = arith.constant 0.353553385 : f32
    %17 = vector.broadcast %cst_14 : f32 to vector<16x32xf32>
    %18 = arith.mulf %16, %17 : vector<16x32xf32>
    %19 = vector.extract_strided_slice %15 {offsets = [0, 32], sizes = [16, 32], strides = [1, 1]} : vector<16x96xf32> to vector<16x32xf32>
    %20 = vector.extract_strided_slice %15 {offsets = [0, 64], sizes = [16, 32], strides = [1, 1]} : vector<16x96xf32> to vector<16x32xf32>
    %21 = vector.extract_strided_slice %18 {offsets = [0, 0], sizes = [16, 8], strides = [1, 1]} : vector<16x32xf32> to vector<16x8xf32>
    %22 = vector.extract_strided_slice %18 {offsets = [0, 8], sizes = [16, 8], strides = [1, 1]} : vector<16x32xf32> to vector<16x8xf32>
    %23 = vector.extract_strided_slice %18 {offsets = [0, 16], sizes = [16, 8], strides = [1, 1]} : vector<16x32xf32> to vector<16x8xf32>
    %24 = vector.extract_strided_slice %18 {offsets = [0, 24], sizes = [16, 8], strides = [1, 1]} : vector<16x32xf32> to vector<16x8xf32>
    %25 = tpu.concatenate %21, %22, %23, %24 in 0 : vector<16x8xf32>, vector<16x8xf32>, vector<16x8xf32>, vector<16x8xf32> -> vector<64x8xf32>
    %26 = vector.extract_strided_slice %19 {offsets = [0, 0], sizes = [16, 8], strides = [1, 1]} : vector<16x32xf32> to vector<16x8xf32>
    %27 = vector.extract_strided_slice %19 {offsets = [0, 8], sizes = [16, 8], strides = [1, 1]} : vector<16x32xf32> to vector<16x8xf32>
    %28 = vector.extract_strided_slice %19 {offsets = [0, 16], sizes = [16, 8], strides = [1, 1]} : vector<16x32xf32> to vector<16x8xf32>
    %29 = vector.extract_strided_slice %19 {offsets = [0, 24], sizes = [16, 8], strides = [1, 1]} : vector<16x32xf32> to vector<16x8xf32>
    %30 = tpu.concatenate %26, %27, %28, %29 in 0 : vector<16x8xf32>, vector<16x8xf32>, vector<16x8xf32>, vector<16x8xf32> -> vector<64x8xf32>
    %31 = vector.extract_strided_slice %20 {offsets = [0, 0], sizes = [16, 8], strides = [1, 1]} : vector<16x32xf32> to vector<16x8xf32>
    %32 = vector.extract_strided_slice %20 {offsets = [0, 8], sizes = [16, 8], strides = [1, 1]} : vector<16x32xf32> to vector<16x8xf32>
    %33 = vector.extract_strided_slice %20 {offsets = [0, 16], sizes = [16, 8], strides = [1, 1]} : vector<16x32xf32> to vector<16x8xf32>
    %34 = vector.extract_strided_slice %20 {offsets = [0, 24], sizes = [16, 8], strides = [1, 1]} : vector<16x32xf32> to vector<16x8xf32>
    %35 = tpu.concatenate %31, %32, %33, %34 in 0 : vector<16x8xf32>, vector<16x8xf32>, vector<16x8xf32>, vector<16x8xf32> -> vector<64x8xf32>
    %cst_15 = arith.constant dense<0.000000e+00> : vector<64x64xf32>
    %36 = tpu.matmul %25, %30, %cst_15 {dimension_numbers = #tpu.dot_dimension_numbers<[1], [1], [0], [0], [0, 0, 1, 0], [], []>} : vector<64x8xf32>, vector<64x8xf32>, vector<64x64xf32> -> vector<64x64xf32>
    %37 = tpu.iota {dimensions = array<i32: 0>} : vector<64x64xi32>
    %38 = tpu.iota {dimensions = array<i32: 1>} : vector<64x64xi32>
    %c4_i32 = arith.constant 4 : i32
    %39 = vector.broadcast %c4_i32 : i32 to vector<64x64xi32>
    %40 = arith.shrsi %37, %39 : vector<64x64xi32>
    %c4_i32_16 = arith.constant 4 : i32
    %41 = vector.broadcast %c4_i32_16 : i32 to vector<64x64xi32>
    %42 = arith.shrsi %38, %41 : vector<64x64xi32>
    %43 = arith.cmpi eq, %40, %42 : vector<64x64xi32>
    %c1_i32 = arith.constant 1 : i32
    %44 = vector.broadcast %c1_i32 : i32 to vector<64x64xi32>
    %45 = arith.andi %37, %44 : vector<64x64xi32>
    %c1_i32_17 = arith.constant 1 : i32
    %46 = vector.broadcast %c1_i32_17 : i32 to vector<64x64xi32>
    %47 = arith.andi %38, %46 : vector<64x64xi32>
    %48 = arith.cmpi eq, %45, %47 : vector<64x64xi32>
    %49 = arith.andi %43, %48 : vector<64x64xi1>
    %cst_18 = arith.constant -1.000000e+30 : f32
    %50 = vector.broadcast %cst_18 : f32 to vector<64x64xf32>
    %51 = arith.select %49, %36, %50 : vector<64x64xi1>, vector<64x64xf32>
    %cst_19 = arith.constant dense<0xFF800000> : vector<64xf32>
    %52 = vector.multi_reduction <maximumf>, %51, %cst_19 [1] : vector<64x64xf32> to vector<64xf32>
    %53 = vector.shape_cast %52 : vector<64xf32> to vector<64x1xf32>
    %54 = vector.broadcast %53 : vector<64x1xf32> to vector<64x64xf32>
    %55 = arith.subf %51, %54 : vector<64x64xf32>
    %56 = math.exp %55 : vector<64x64xf32>
    %cst_20 = arith.constant dense<0.000000e+00> : vector<64xf32>
    %57 = vector.multi_reduction <add>, %56, %cst_20 [1] : vector<64x64xf32> to vector<64xf32>
    %58 = vector.shape_cast %57 : vector<64xf32> to vector<64x1xf32>
    %59 = tpu.reciprocal %58 {approx = true} : vector<64x1xf32> -> vector<64x1xf32>
    %60 = vector.broadcast %59 : vector<64x1xf32> to vector<64x64xf32>
    %61 = arith.mulf %56, %60 : vector<64x64xf32>
    %cst_21 = arith.constant dense<0.000000e+00> : vector<64x8xf32>
    %62 = tpu.matmul %61, %35, %cst_21 {dimension_numbers = #tpu.dot_dimension_numbers<[1], [0], [0], [1], [0, 0, 1, 1], [], []>} : vector<64x64xf32>, vector<64x8xf32>, vector<64x8xf32> -> vector<64x8xf32>
    %63 = vector.extract_strided_slice %62 {offsets = [0, 0], sizes = [16, 8], strides = [1, 1]} : vector<64x8xf32> to vector<16x8xf32>
    %64 = vector.extract_strided_slice %62 {offsets = [16, 0], sizes = [16, 8], strides = [1, 1]} : vector<64x8xf32> to vector<16x8xf32>
    %65 = vector.extract_strided_slice %62 {offsets = [32, 0], sizes = [16, 8], strides = [1, 1]} : vector<64x8xf32> to vector<16x8xf32>
    %66 = vector.extract_strided_slice %62 {offsets = [48, 0], sizes = [16, 8], strides = [1, 1]} : vector<64x8xf32> to vector<16x8xf32>
    %67 = tpu.concatenate %63, %64, %65, %66 in 1 : vector<16x8xf32>, vector<16x8xf32>, vector<16x8xf32>, vector<16x8xf32> -> vector<16x32xf32>
    %cst_22 = arith.constant dense<0.000000e+00> : vector<16x32xf32>
    %68 = tpu.matmul %67, %2, %cst_22 {dimension_numbers = #tpu.dot_dimension_numbers<[1], [0], [0], [1], [0, 0, 1, 1], [], []>} : vector<16x32xf32>, vector<32x32xf32>, vector<16x32xf32> -> vector<16x32xf32>
    %69 = vector.broadcast %6 : vector<1x32xf32> to vector<16x32xf32>
    %70 = arith.addf %68, %69 : vector<16x32xf32>
    %71 = arith.addf %0, %70 : vector<16x32xf32>
    %cst_23 = arith.constant dense<0.000000e+00> : vector<16xf32>
    %72 = vector.multi_reduction <add>, %71, %cst_23 [1] : vector<16x32xf32> to vector<16xf32>
    %73 = vector.shape_cast %72 : vector<16xf32> to vector<16x1xf32>
    %cst_24 = arith.constant 3.200000e+01 : f32
    %74 = vector.broadcast %cst_24 : f32 to vector<16x1xf32>
    %75 = arith.divf %73, %74 : vector<16x1xf32>
    %76 = vector.broadcast %75 : vector<16x1xf32> to vector<16x32xf32>
    %77 = arith.subf %71, %76 : vector<16x32xf32>
    %78 = vector.broadcast %75 : vector<16x1xf32> to vector<16x32xf32>
    %79 = arith.subf %71, %78 : vector<16x32xf32>
    %80 = arith.mulf %77, %79 : vector<16x32xf32>
    %cst_25 = arith.constant dense<0.000000e+00> : vector<16xf32>
    %81 = vector.multi_reduction <add>, %80, %cst_25 [1] : vector<16x32xf32> to vector<16xf32>
    %82 = vector.shape_cast %81 : vector<16xf32> to vector<16x1xf32>
    %cst_26 = arith.constant 3.200000e+01 : f32
    %83 = vector.broadcast %cst_26 : f32 to vector<16x1xf32>
    %84 = arith.divf %82, %83 : vector<16x1xf32>
    %85 = vector.broadcast %75 : vector<16x1xf32> to vector<16x32xf32>
    %86 = arith.subf %71, %85 : vector<16x32xf32>
    %cst_27 = arith.constant 9.99999974E-6 : f32
    %87 = vector.broadcast %cst_27 : f32 to vector<16x1xf32>
    %88 = arith.addf %84, %87 : vector<16x1xf32>
    %89 = math.rsqrt %88 : vector<16x1xf32>
    %90 = vector.broadcast %89 : vector<16x1xf32> to vector<16x32xf32>
    %91 = arith.mulf %86, %90 : vector<16x32xf32>
    %92 = vector.broadcast %7 : vector<1x32xf32> to vector<16x32xf32>
    %93 = arith.mulf %91, %92 : vector<16x32xf32>
    %94 = vector.broadcast %8 : vector<1x32xf32> to vector<16x32xf32>
    %95 = arith.addf %93, %94 : vector<16x32xf32>
    %cst_28 = arith.constant dense<0.000000e+00> : vector<16x64xf32>
    %96 = tpu.matmul %95, %3, %cst_28 {dimension_numbers = #tpu.dot_dimension_numbers<[1], [0], [0], [1], [0, 0, 1, 1], [], []>} : vector<16x32xf32>, vector<32x64xf32>, vector<16x64xf32> -> vector<16x64xf32>
    %97 = vector.broadcast %9 : vector<1x64xf32> to vector<16x64xf32>
    %98 = arith.addf %96, %97 : vector<16x64xf32>
    %cst_29 = arith.constant 0.000000e+00 : f32
    %99 = vector.broadcast %cst_29 : f32 to vector<16x64xf32>
    %100 = arith.maximumf %98, %99 : vector<16x64xf32>
    %cst_30 = arith.constant dense<0.000000e+00> : vector<16x32xf32>
    %101 = tpu.matmul %100, %4, %cst_30 {dimension_numbers = #tpu.dot_dimension_numbers<[1], [0], [0], [1], [0, 0, 1, 1], [], []>} : vector<16x64xf32>, vector<64x32xf32>, vector<16x32xf32> -> vector<16x32xf32>
    %102 = vector.broadcast %10 : vector<1x32xf32> to vector<16x32xf32>
    %103 = arith.addf %101, %102 : vector<16x32xf32>
    %104 = arith.addf %95, %103 : vector<16x32xf32>
    %cst_31 = arith.constant dense<0.000000e+00> : vector<16xf32>
    %105 = vector.multi_reduction <add>, %104, %cst_31 [1] : vector<16x32xf32> to vector<16xf32>
    %106 = vector.shape_cast %105 : vector<16xf32> to vector<16x1xf32>
    %cst_32 = arith.constant 3.200000e+01 : f32
    %107 = vector.broadcast %cst_32 : f32 to vector<16x1xf32>
    %108 = arith.divf %106, %107 : vector<16x1xf32>
    %109 = vector.broadcast %108 : vector<16x1xf32> to vector<16x32xf32>
    %110 = arith.subf %104, %109 : vector<16x32xf32>
    %111 = vector.broadcast %108 : vector<16x1xf32> to vector<16x32xf32>
    %112 = arith.subf %104, %111 : vector<16x32xf32>
    %113 = arith.mulf %110, %112 : vector<16x32xf32>
    %cst_33 = arith.constant dense<0.000000e+00> : vector<16xf32>
    %114 = vector.multi_reduction <add>, %113, %cst_33 [1] : vector<16x32xf32> to vector<16xf32>
    %115 = vector.shape_cast %114 : vector<16xf32> to vector<16x1xf32>
    %cst_34 = arith.constant 3.200000e+01 : f32
    %116 = vector.broadcast %cst_34 : f32 to vector<16x1xf32>
    %117 = arith.divf %115, %116 : vector<16x1xf32>
    %118 = vector.broadcast %108 : vector<16x1xf32> to vector<16x32xf32>
    %119 = arith.subf %104, %118 : vector<16x32xf32>
    %cst_35 = arith.constant 9.99999974E-6 : f32
    %120 = vector.broadcast %cst_35 : f32 to vector<16x1xf32>
    %121 = arith.addf %117, %120 : vector<16x1xf32>
    %122 = math.rsqrt %121 : vector<16x1xf32>
    %123 = vector.broadcast %122 : vector<16x1xf32> to vector<16x32xf32>
    %124 = arith.mulf %119, %123 : vector<16x32xf32>
    %125 = vector.broadcast %11 : vector<1x32xf32> to vector<16x32xf32>
    %126 = arith.mulf %124, %125 : vector<16x32xf32>
    %127 = vector.broadcast %12 : vector<1x32xf32> to vector<16x32xf32>
    %128 = arith.addf %126, %127 : vector<16x32xf32>
    %c0_36 = arith.constant 0 : index
    %c0_37 = arith.constant 0 : index
    %129 = vector.load %arg3[%c0_36, %c0_37] : memref<16x32xf32, #tpu.memory_space<vmem>>, vector<16x32xf32>
    tpu.vector_store %arg3[%c0_36, %c0_37], %128 {strides = array<i32>} : memref<16x32xf32, #tpu.memory_space<vmem>>, vector<16x32xf32>,
    return
  }
  func.func @transform_0(%arg0: i32) -> (i32, i32) {
    %c0_i32 = arith.constant 0 : i32
    %c0_i32_0 = arith.constant 0 : i32
    %c0_i32_1 = arith.constant 0 : i32
    return %c0_i32, %c0_i32_0 : i32, i32
  }
  func.func @transform_1(%arg0: i32) -> (i32, i32) {
    %c0_i32 = arith.constant 0 : i32
    %c0_i32_0 = arith.constant 0 : i32
    %c0_i32_1 = arith.constant 0 : i32
    return %c0_i32, %c0_i32_0 : i32, i32
  }
  func.func @transform_2(%arg0: i32) -> (i32, i32) {
    %c0_i32 = arith.constant 0 : i32
    %c0_i32_0 = arith.constant 0 : i32
    %c0_i32_1 = arith.constant 0 : i32
    return %c0_i32, %c0_i32_0 : i32, i32
  }
}

</mosaic_0001>

<llo_original>
// kernel: tpu_custom_call.1
$region0: #{tpu_custom_call.1}
  #allocation0 [shape = 'u32[]', space=smem, size = 0x4, offset = 0x4, fixed_abs, tag = 'smem constant byte address 0x4 - core index']
  #allocation1 [shape = 'u32[72,128]{1,0:T(1,128)}', space=vmem, size = 0x9000, scoped, tag = 'internal scratch']
  %s0 = inlined_call_operand.hbm [shape: f32[16,32], index: 0, kind: input, shape index: {}]
  %s1 = inlined_call_operand.hbm [shape: f32[224,128], index: 1, kind: input, shape index: {}]
  %s2 = inlined_call_operand.hbm [shape: f32[16,32], index: 2, kind: output, shape index: {}]
  %s3 = sld [smem:[#allocation0]]
  $region26: #{tpu_custom_call.1} parent=0
    _
  %s5 = ssub.s32 1, %s3
  %s6 = scalar_select 0, %s5, %s3
  $region1: #{tpu_custom_call.1} parent=0
    #allocation2 [shape = 'u8[8192]{0}', space=vmem, size = 0x2000, scoped, tag = 'input window, operand 0, single buffered']
    #allocation3 [shape = 's32[1]{0}', space=sflag, size = 0x4, scoped, tag = 'scoped memory for tpu_custom_call.1']
    #allocation4 [shape = 's32[1]{0}', space=sflag, size = 0x4, scoped, tag = 'scoped memory for tpu_custom_call.1']
    #allocation5 [shape = 'u8[114688]{0}', space=vmem, size = 0x1c000, scoped, tag = 'input window, operand 1, single buffered']
    #allocation6 [shape = 's32[1]{0}', space=sflag, size = 0x4, scoped, tag = 'scoped memory for tpu_custom_call.1']
    #allocation7 [shape = 'u8[8192]{0}', space=vmem, size = 0x2000, scoped, tag = 'output window, operand 0, single buffered']
    %7 = vsyncpa [#allocation3], 0
    %8 = vsyncpa [#allocation6], 0
    %9 = vsyncpa [#allocation4], 0
    // Predicated region
    $region2: #{tpu_custom_call.1} parent=1 // pred_check
      _
    $region3: #{tpu_custom_call.1} parent=1 // pred_check_branch
      %11 = sbr.rel (0) target = $region5
    $region4: #{tpu_custom_call.1} parent=1 // pred_region
      %13 = vsyncadd [#allocation3], 0
      %s14 = sshll.u32 %s0, 4
      %s15 = int_to_ptr.hbm [resolvable:$true] %s14
      %s16 = sshll.u32 [#allocation2], 4
      %s17 = int_to_ptr.vmem [resolvable:$true] %s16
      %22 = dma.hbm_to_vmem [thread:$0]  %s15, 256, %s17, [#allocation3], 128, 128, 8
    $region5: #{tpu_custom_call.1} parent=1 // pred_fallthru
      _
    // Predicated region
    $region6: #{tpu_custom_call.1} parent=1 // pred_check
      _
    $region7: #{tpu_custom_call.1} parent=1 // pred_check_branch
      %24 = sbr.rel (0) target = $region9
    $region8: #{tpu_custom_call.1} parent=1 // pred_region
      %26 = vsyncadd [#allocation6], 0
      %s27 = sshll.u32 %s1, 4
      %s28 = int_to_ptr.hbm [resolvable:$true] %s27
      %s29 = sshll.u32 [#allocation5], 4
      %s30 = int_to_ptr.vmem [resolvable:$true] %s29
      %35 = dma.hbm_to_vmem [thread:$0]  %s28, 3584, %s30, [#allocation6], 128, 128, 8
    $region9: #{tpu_custom_call.1} parent=1 // pred_fallthru
      _
    // Predicated region
    $region10: #{tpu_custom_call.1} parent=1 // pred_check
      _
    $region11: #{tpu_custom_call.1} parent=1 // pred_check_branch
      %37 = sbr.rel (0) target = $region13
    $region12: #{tpu_custom_call.1} parent=1 // pred_region
      %39 = dma.done [#allocation3], 256
    $region13: #{tpu_custom_call.1} parent=1 // pred_fallthru
      _
    // Predicated region
    $region14: #{tpu_custom_call.1} parent=1 // pred_check
      _
    $region15: #{tpu_custom_call.1} parent=1 // pred_check_branch
      %41 = sbr.rel (0) target = $region17
    $region16: #{tpu_custom_call.1} parent=1 // pred_region
      %43 = dma.done [#allocation6], 3584
    $region17: #{tpu_custom_call.1} parent=1 // pred_fallthru
      _
    %v44 = vld [vmem:[#allocation2] sm:$0xff]
    %v45 = vld [vmem:[#allocation2 + $0x8] sm:$0xff]
    %v46 = vld [vmem:[#allocation5] sm:$0xff]
    %v47 = vld [vmem:[#allocation5 + $0x8] sm:$0xff]
    %v48 = vld [vmem:[#allocation5 + $0x10] sm:$0xff]
    %v49 = vld [vmem:[#allocation5 + $0x18] sm:$0xff]
    %v50 = vld [vmem:[#allocation5 + $0x20] sm:$0xff]
    %v51 = vld [vmem:[#allocation5 + $0x28] sm:$0xff]
    %v52 = vld [vmem:[#allocation5 + $0x30] sm:$0xff]
    %v53 = vld [vmem:[#allocation5 + $0x38] sm:$0xff]
    %v54 = vld [vmem:[#allocation5 + $0x40] sm:$0xff]
    %v55 = vld [vmem:[#allocation5 + $0x48] sm:$0xff]
    %v56 = vld [vmem:[#allocation5 + $0x50] sm:$0xff]
    %v57 = vld [vmem:[#allocation5 + $0x58] sm:$0xff]
    %v58 = vld [vmem:[#allocation5 + $0x60] sm:$0xff]
    %v59 = vld [vmem:[#allocation5 + $0x68] sm:$0xff]
    %v60 = vld [vmem:[#allocation5 + $0x70] sm:$0xff]
    %v61 = vld [vmem:[#allocation5 + $0x78] sm:$0xff]
    %v62 = vld [vmem:[#allocation5 + $0x80] sm:$0xff]
    %v63 = vld [vmem:[#allocation5 + $0x88] sm:$0xff]
    %v64 = vld [vmem:[#allocation5 + $0x90] sm:$0xff]
    %v65 = vld [vmem:[#allocation5 + $0x98] sm:$0xff]
    %v66 = vld [vmem:[#allocation5 + $0xa0] sm:$0x1]
    %v67 = vld [vmem:[#allocation5 + $0xa8] sm:$0x1]
    %v68 = vld [vmem:[#allocation5 + $0xb0] sm:$0x1]
    %v69 = vld [vmem:[#allocation5 + $0xb8] sm:$0x1]
    %v70 = vld [vmem:[#allocation5 + $0xc0] sm:$0x1]
    %v71 = vld [vmem:[#allocation5 + $0xc8] sm:$0x1]
    %v72 = vld [vmem:[#allocation5 + $0xd0] sm:$0x1]
    %v73 = vld [vmem:[#allocation5 + $0xd8] sm:$0x1]
    %v74 = vperm.slane %v66, 0
    %vm75 = vcmask 261120
    %v77 = vsel %vm75, %v44, 0
    %v80 = vsel %vm75, %v45, 0
    %82 = vmatpush.msra.mxu0 0.0
    %83 = vmatpush.msra.mxu0 0.0
    %84 = vmatpush.msra.mxu0 0.0
    %85 = vmatpush.msra.mxu0 0.0
    %86 = vmatpush.msra.mxu0 0.0
    %87 = vmatpush.msra.mxu0 0.0
    %88 = vmatpush.msra.mxu0 0.0
    %89 = vmatpush.msra.mxu0 0.0
    %90 = vmatpush.msra.mxu0 0.0
    %91 = vmatpush.msra.mxu0 0.0
    %92 = vmatpush.msra.mxu0 0.0
    %93 = vmatpush.msra.mxu0 0.0
    %94 = vmatpush.msra.mxu0 %v49
    %95 = vmatpush.msra.mxu0 %v48
    %96 = vmatpush.msra.mxu0 %v47
    %97 = vmatpush.msra.mxu0 %v46
    %98 = vmatmul.f32.gmra.mxu0 %v77
    %v99 = vpop.f32.mrf.mxu0
    %v100 = vadd.f32 %v74, %v99
    %101 = vmatmul.f32.gmra.mxu0 %v80
    %v102 = vpop.f32.mrf.mxu0
    %v103 = vadd.f32 %v74, %v102
    %104 = vdwg.mxu0
    %v105 = vmul.f32 %v100, 0.35355338
    %v106 = vmul.f32 %v103, 0.35355338
    %109 = vrot.lane.b32.xlu0 %v105, 120
    %v110 = vpop.permute.xlu0 %109
    %111 = vrot.lane.b32.xlu0 %v106, 120
    %v112 = vpop.permute.xlu0 %111
    %113 = vrot.lane.b32.xlu0 %v105, 112
    %v114 = vpop.permute.xlu0 %113
    %115 = vrot.lane.b32.xlu0 %v106, 112
    %v116 = vpop.permute.xlu0 %115
    %117 = vrot.lane.b32.xlu0 %v105, 104
    %v118 = vpop.permute.xlu0 %117
    %119 = vrot.lane.b32.xlu0 %v106, 104
    %v120 = vpop.permute.xlu0 %119
    %123 = vrot.lane.b32.xlu0 %v100, 120
    %v124 = vpop.permute.xlu0 %123
    %125 = vrot.lane.b32.xlu0 %v103, 120
    %v126 = vpop.permute.xlu0 %125
    %127 = vrot.lane.b32.xlu0 %v100, 112
    %v128 = vpop.permute.xlu0 %127
    %129 = vrot.lane.b32.xlu0 %v103, 112
    %v130 = vpop.permute.xlu0 %129
    %131 = vrot.lane.b32.xlu0 %v100, 104
    %v132 = vpop.permute.xlu0 %131
    %133 = vrot.lane.b32.xlu0 %v103, 104
    %v134 = vpop.permute.xlu0 %133
    %135 = vrot.lane.b32.xlu0 %v100, 96
    %v136 = vpop.permute.xlu0 %135
    %137 = vrot.lane.b32.xlu0 %v103, 96
    %v138 = vpop.permute.xlu0 %137
    %139 = vrot.lane.b32.xlu0 %v124, 96
    %v140 = vpop.permute.xlu0 %139
    %141 = vrot.lane.b32.xlu0 %v126, 96
    %v142 = vpop.permute.xlu0 %141
    %143 = vrot.lane.b32.xlu0 %v128, 96
    %v144 = vpop.permute.xlu0 %143
    %145 = vrot.lane.b32.xlu0 %v130, 96
    %v146 = vpop.permute.xlu0 %145
    %147 = vrot.lane.b32.xlu0 %v132, 96
    %v148 = vpop.permute.xlu0 %147
    %149 = vrot.lane.b32.xlu0 %v134, 96
    %v150 = vpop.permute.xlu0 %149
    %vm151 = vcmask 64512
    %v152 = vsel %vm151, %v105, 0
    %v154 = vsel %vm151, %v106, 0
    %v156 = vsel %vm151, %v110, 0
    %v158 = vsel %vm151, %v112, 0
    %v160 = vsel %vm151, %v114, 0
    %v162 = vsel %vm151, %v116, 0
    %v164 = vsel %vm151, %v118, 0
    %v166 = vsel %vm151, %v120, 0
    %v168 = vsel %vm151, %v136, 0
    %v170 = vsel %vm151, %v138, 0
    %v172 = vsel %vm151, %v140, 0
    %v174 = vsel %vm151, %v142, 0
    %v176 = vsel %vm151, %v144, 0
    %v178 = vsel %vm151, %v146, 0
    %v180 = vsel %vm151, %v148, 0
    %v182 = vsel %vm151, %v150, 0
    %184 = vmatpush.xpose.msra.mxu0 0.0
    %185 = vmatpush.xpose.msra.mxu0 0.0
    %186 = vmatpush.xpose.msra.mxu0 0.0
    %187 = vmatpush.xpose.msra.mxu0 0.0
    %188 = vmatpush.xpose.msra.mxu0 0.0
    %189 = vmatpush.xpose.msra.mxu0 0.0
    %190 = vmatpush.xpose.msra.mxu0 0.0
    %191 = vmatpush.xpose.msra.mxu0 0.0
    %192 = vmatpush.xpose.msra.mxu0 %v182
    %193 = vmatpush.xpose.msra.mxu0 %v180
    %194 = vmatpush.xpose.msra.mxu0 %v178
    %195 = vmatpush.xpose.msra.mxu0 %v176
    %196 = vmatpush.xpose.msra.mxu0 %v174
    %197 = vmatpush.xpose.msra.mxu0 %v172
    %198 = vmatpush.xpose.msra.mxu0 %v170
    %199 = vmatpush.xpose.msra.mxu0 %v168
    %200 = vmatmul.f32.gmra.mxu0 %v152
    %v201 = vpop.f32.mrf.mxu0
    %v202 = vadd.f32 0.0, %v201
    %203 = vmatmul.f32.gmra.mxu0 %v154
    %v204 = vpop.f32.mrf.mxu0
    %v205 = vadd.f32 0.0, %v204
    %206 = vmatmul.f32.gmra.mxu0 %v156
    %v207 = vpop.f32.mrf.mxu0
    %v208 = vadd.f32 0.0, %v207
    %209 = vmatmul.f32.gmra.mxu0 %v158
    %v210 = vpop.f32.mrf.mxu0
    %v211 = vadd.f32 0.0, %v210
    %212 = vmatmul.f32.gmra.mxu0 %v160
    %v213 = vpop.f32.mrf.mxu0
    %v214 = vadd.f32 0.0, %v213
    %215 = vmatmul.f32.gmra.mxu0 %v162
    %v216 = vpop.f32.mrf.mxu0
    %v217 = vadd.f32 0.0, %v216
    %218 = vmatmul.f32.gmra.mxu0 %v164
    %v219 = vpop.f32.mrf.mxu0
    %v220 = vadd.f32 0.0, %v219
    %221 = vmatmul.f32.gmra.mxu0 %v166
    %v222 = vpop.f32.mrf.mxu0
    %v223 = vadd.f32 0.0, %v222
    %224 = vdwg.mxu0
    %v225 = vlaneseq
    %v226 = vshrl.u32 %v225, 7
    %v227 = vadd.s32 %v226, 8
    %v228 = vadd.s32 %v226, 16
    %v229 = vadd.s32 %v226, 24
    %v230 = vadd.s32 %v226, 32
    %v231 = vadd.s32 %v226, 40
    %v232 = vadd.s32 %v226, 48
    %v233 = vadd.s32 %v226, 56
    %v234 = vlaneseq
    %v235 = vand.u32 %v234, 127
    %v236 = vshra.s32 %v226, 4
    %v237 = vshra.s32 %v227, 4
    %v238 = vshra.s32 %v228, 4
    %v239 = vshra.s32 %v229, 4
    %v240 = vshra.s32 %v230, 4
    %v241 = vshra.s32 %v231, 4
    %v242 = vshra.s32 %v232, 4
    %v243 = vshra.s32 %v233, 4
    %v244 = vshra.s32 %v235, 4
    %vm245 = vcmp.eq.s32.totalorder %v236, %v244
    %vm246 = vcmp.eq.s32.totalorder %v237, %v244
    %vm247 = vcmp.eq.s32.totalorder %v238, %v244
    %vm248 = vcmp.eq.s32.totalorder %v239, %v244
    %vm249 = vcmp.eq.s32.totalorder %v240, %v244
    %vm250 = vcmp.eq.s32.totalorder %v241, %v244
    %vm251 = vcmp.eq.s32.totalorder %v242, %v244
    %vm252 = vcmp.eq.s32.totalorder %v243, %v244
    %v253 = vand.u32 %v226, 1
    %v254 = vand.u32 %v227, 1
    %v255 = vand.u32 %v228, 1
    %v256 = vand.u32 %v229, 1
    %v257 = vand.u32 %v230, 1
    %v258 = vand.u32 %v231, 1
    %v259 = vand.u32 %v232, 1
    %v260 = vand.u32 %v233, 1
    %v261 = vand.u32 %v235, 1
    %vm262 = vcmp.eq.s32.totalorder %v253, %v261
    %vm263 = vcmp.eq.s32.totalorder %v254, %v261
    %vm264 = vcmp.eq.s32.totalorder %v255, %v261
    %vm265 = vcmp.eq.s32.totalorder %v256, %v261
    %vm266 = vcmp.eq.s32.totalorder %v257, %v261
    %vm267 = vcmp.eq.s32.totalorder %v258, %v261
    %vm268 = vcmp.eq.s32.totalorder %v259, %v261
    %vm269 = vcmp.eq.s32.totalorder %v260, %v261
    %vm270 = vmand %vm245, %vm262
    %vm271 = vmand %vm246, %vm263
    %vm272 = vmand %vm247, %vm264
    %vm273 = vmand %vm248, %vm265
    %vm274 = vmand %vm249, %vm266
    %vm275 = vmand %vm250, %vm267
    %vm276 = vmand %vm251, %vm268
    %vm277 = vmand %vm252, %vm269
    %v278 = vsel %vm270, %v202, -1e+30
    %v279 = vsel %vm271, %v205, -1e+30
    %v280 = vsel %vm272, %v208, -1e+30
    %v281 = vsel %vm273, %v211, -1e+30
    %v282 = vsel %vm274, %v214, -1e+30
    %v283 = vsel %vm275, %v217, -1e+30
    %v284 = vsel %vm276, %v220, -1e+30
    %v285 = vsel %vm277, %v223, -1e+30
    %vm286 = vcmask 523264
    %v287 = vsel %vm286, %v278, -inf
    %288 = vmax.xlane.f32.xlu0 %v287
    %v289 = vpop.xlane.xlu0 %288
    %v290 = vsel %vm286, %v279, -inf
    %291 = vmax.xlane.f32.xlu0 %v290
    %v292 = vpop.xlane.xlu0 %291
    %v293 = vsel %vm286, %v280, -inf
    %294 = vmax.xlane.f32.xlu0 %v293
    %v295 = vpop.xlane.xlu0 %294
    %v296 = vsel %vm286, %v281, -inf
    %297 = vmax.xlane.f32.xlu0 %v296
    %v298 = vpop.xlane.xlu0 %297
    %v299 = vsel %vm286, %v282, -inf
    %300 = vmax.xlane.f32.xlu0 %v299
    %v301 = vpop.xlane.xlu0 %300
    %v302 = vsel %vm286, %v283, -inf
    %303 = vmax.xlane.f32.xlu0 %v302
    %v304 = vpop.xlane.xlu0 %303
    %v305 = vsel %vm286, %v284, -inf
    %306 = vmax.xlane.f32.xlu0 %v305
    %v307 = vpop.xlane.xlu0 %306
    %v308 = vsel %vm286, %v285, -inf
    %309 = vmax.xlane.f32.xlu0 %v308
    %v310 = vpop.xlane.xlu0 %309
    %v311 = vsub.f32 %v278, %v289
    %v312 = vsub.f32 %v279, %v292
    %v313 = vsub.f32 %v280, %v295
    %v314 = vsub.f32 %v281, %v298
    %v315 = vsub.f32 %v282, %v301
    %v316 = vsub.f32 %v283, %v304
    %v317 = vsub.f32 %v284, %v307
    %v318 = vsub.f32 %v285, %v310
    %v319 = vmul.f32 %v311, 1.442695
    %v320 = vpow.pop %v319
    %v321 = vmul.f32 %v312, 1.442695
    %v322 = vpow.pop %v321
    %v323 = vmul.f32 %v313, 1.442695
    %v324 = vpow.pop %v323
    %v325 = vmul.f32 %v314, 1.442695
    %v326 = vpow.pop %v325
    %v327 = vmul.f32 %v315, 1.442695
    %v328 = vpow.pop %v327
    %v329 = vmul.f32 %v316, 1.442695
    %v330 = vpow.pop %v329
    %v331 = vmul.f32 %v317, 1.442695
    %v332 = vpow.pop %v331
    %v333 = vmul.f32 %v318, 1.442695
    %v334 = vpow.pop %v333
    %v335 = vsel %vm286, %v320, 0.0
    %336 = vadd.xlane.f32.xlu0 %v335
    %v337 = vpop.xlane.xlu0 %336
    %v338 = vsel %vm286, %v322, 0.0
    %339 = vadd.xlane.f32.xlu0 %v338
    %v340 = vpop.xlane.xlu0 %339
    %v341 = vsel %vm286, %v324, 0.0
    %342 = vadd.xlane.f32.xlu0 %v341
    %v343 = vpop.xlane.xlu0 %342
    %v344 = vsel %vm286, %v326, 0.0
    %345 = vadd.xlane.f32.xlu0 %v344
    %v346 = vpop.xlane.xlu0 %345
    %v347 = vsel %vm286, %v328, 0.0
    %348 = vadd.xlane.f32.xlu0 %v347
    %v349 = vpop.xlane.xlu0 %348
    %v350 = vsel %vm286, %v330, 0.0
    %351 = vadd.xlane.f32.xlu0 %v350
    %v352 = vpop.xlane.xlu0 %351
    %v353 = vsel %vm286, %v332, 0.0
    %354 = vadd.xlane.f32.xlu0 %v353
    %v355 = vpop.xlane.xlu0 %354
    %v356 = vsel %vm286, %v334, 0.0
    %357 = vadd.xlane.f32.xlu0 %v356
    %v358 = vpop.xlane.xlu0 %357
    %v359 = vrcp.pop %v337
    %v360 = vrcp.pop %v340
    %v361 = vrcp.pop %v343
    %v362 = vrcp.pop %v346
    %v363 = vrcp.pop %v349
    %v364 = vrcp.pop %v352
    %v365 = vrcp.pop %v355
    %v366 = vrcp.pop %v358
    %v367 = vmul.f32 %v320, %v359
    %v368 = vmul.f32 %v322, %v360
    %v369 = vmul.f32 %v324, %v361
    %v370 = vmul.f32 %v326, %v362
    %v371 = vmul.f32 %v328, %v363
    %v372 = vmul.f32 %v330, %v364
    %v373 = vmul.f32 %v332, %v365
    %v374 = vmul.f32 %v334, %v366
    %375 = vrot.lane.b32.xlu0 %v100, 64
    %v376 = vpop.permute.xlu0 %375
    %377 = vrot.lane.b32.xlu0 %v103, 64
    %v378 = vpop.permute.xlu0 %377
    %379 = vrot.lane.b32.xlu0 %v124, 64
    %v380 = vpop.permute.xlu0 %379
    %381 = vrot.lane.b32.xlu0 %v126, 64
    %v382 = vpop.permute.xlu0 %381
    %383 = vrot.lane.b32.xlu0 %v128, 64
    %v384 = vpop.permute.xlu0 %383
    %385 = vrot.lane.b32.xlu0 %v130, 64
    %v386 = vpop.permute.xlu0 %385
    %387 = vrot.lane.b32.xlu0 %v132, 64
    %v388 = vpop.permute.xlu0 %387
    %389 = vrot.lane.b32.xlu0 %v134, 64
    %v390 = vpop.permute.xlu0 %389
    %v400 = vsel %vm286, %v367, 0
    %v403 = vsel %vm286, %v368, 0
    %v406 = vsel %vm286, %v369, 0
    %v409 = vsel %vm286, %v370, 0
    %v412 = vsel %vm286, %v371, 0
    %v415 = vsel %vm286, %v372, 0
    %v418 = vsel %vm286, %v373, 0
    %v421 = vsel %vm286, %v374, 0
    %423 = vmatpush.msra.mxu0 0.0
    %424 = vmatpush.msra.mxu0 0.0
    %425 = vmatpush.msra.mxu0 0.0
    %426 = vmatpush.msra.mxu0 0.0
    %427 = vmatpush.msra.mxu0 0.0
    %428 = vmatpush.msra.mxu0 0.0
    %429 = vmatpush.msra.mxu0 0.0
    %430 = vmatpush.msra.mxu0 0.0
    %431 = vmatpush.msra.mxu0 %v390
    %432 = vmatpush.msra.mxu0 %v388
    %433 = vmatpush.msra.mxu0 %v386
    %434 = vmatpush.msra.mxu0 %v384
    %435 = vmatpush.msra.mxu0 %v382
    %436 = vmatpush.msra.mxu0 %v380
    %437 = vmatpush.msra.mxu0 %v378
    %438 = vmatpush.msra.mxu0 %v376
    %439 = vmatmul.f32.gmra.mxu0 %v400
    %v440 = vpop.f32.mrf.mxu0
    %v441 = vadd.f32 0.0, %v440
    %442 = vmatmul.f32.gmra.mxu0 %v403
    %v443 = vpop.f32.mrf.mxu0
    %v444 = vadd.f32 0.0, %v443
    %445 = vmatmul.f32.gmra.mxu0 %v406
    %v446 = vpop.f32.mrf.mxu0
    %v447 = vadd.f32 0.0, %v446
    %448 = vmatmul.f32.gmra.mxu0 %v409
    %v449 = vpop.f32.mrf.mxu0
    %v450 = vadd.f32 0.0, %v449
    %451 = vmatmul.f32.gmra.mxu0 %v412
    %v452 = vpop.f32.mrf.mxu0
    %v453 = vadd.f32 0.0, %v452
    %454 = vmatmul.f32.gmra.mxu0 %v415
    %v455 = vpop.f32.mrf.mxu0
    %v456 = vadd.f32 0.0, %v455
    %457 = vmatmul.f32.gmra.mxu0 %v418
    %v458 = vpop.f32.mrf.mxu0
    %v459 = vadd.f32 0.0, %v458
    %460 = vmatmul.f32.gmra.mxu0 %v421
    %v461 = vpop.f32.mrf.mxu0
    %v462 = vadd.f32 0.0, %v461
    %463 = vdwg.mxu0
    %466 = vrot.lane.b32.xlu0 %v447, 8
    %v467 = vpop.permute.xlu0 %466
    %468 = vrot.lane.b32.xlu0 %v450, 8
    %v469 = vpop.permute.xlu0 %468
    %474 = vrot.lane.b32.xlu0 %v453, 16
    %v475 = vpop.permute.xlu0 %474
    %476 = vrot.lane.b32.xlu0 %v456, 16
    %v477 = vpop.permute.xlu0 %476
    %482 = vrot.lane.b32.xlu0 %v459, 24
    %v483 = vpop.permute.xlu0 %482
    %484 = vrot.lane.b32.xlu0 %v462, 24
    %v485 = vpop.permute.xlu0 %484
    %v488 = vsel %vm151, %v441, %v467
    %v489 = vsel %vm151, %v444, %v469
    %vm490 = vcmask 130048
    %v491 = vsel %vm490, %v488, %v475
    %v492 = vsel %vm490, %v489, %v477
    %vm493 = vcmask 195584
    %v494 = vsel %vm493, %v491, %v483
    %v495 = vsel %vm493, %v492, %v485
    %v496 = vperm.slane %v67, 0
    %v498 = vsel %vm75, %v494, 0
    %v501 = vsel %vm75, %v495, 0
    %503 = vmatpush.msra.mxu0 0.0
    %504 = vmatpush.msra.mxu0 0.0
    %505 = vmatpush.msra.mxu0 0.0
    %506 = vmatpush.msra.mxu0 0.0
    %507 = vmatpush.msra.mxu0 0.0
    %508 = vmatpush.msra.mxu0 0.0
    %509 = vmatpush.msra.mxu0 0.0
    %510 = vmatpush.msra.mxu0 0.0
    %511 = vmatpush.msra.mxu0 0.0
    %512 = vmatpush.msra.mxu0 0.0
    %513 = vmatpush.msra.mxu0 0.0
    %514 = vmatpush.msra.mxu0 0.0
    %515 = vmatpush.msra.mxu0 %v53
    %516 = vmatpush.msra.mxu0 %v52
    %517 = vmatpush.msra.mxu0 %v51
    %518 = vmatpush.msra.mxu0 %v50
    %519 = vmatmul.f32.gmra.mxu0 %v498
    %v520 = vpop.f32.mrf.mxu0
    %v521 = vadd.f32 %v496, %v520
    %522 = vmatmul.f32.gmra.mxu0 %v501
    %v523 = vpop.f32.mrf.mxu0
    %v524 = vadd.f32 %v496, %v523
    %525 = vdwg.mxu0
    %v526 = vadd.f32 %v44, %v521
    %v527 = vadd.f32 %v45, %v524
    %v528 = vsel %vm75, %v526, 0.0
    %529 = vadd.xlane.f32.xlu0 %v528
    %v530 = vpop.xlane.xlu0 %529
    %v531 = vsel %vm75, %v527, 0.0
    %532 = vadd.xlane.f32.xlu0 %v531
    %v533 = vpop.xlane.xlu0 %532
    %v534 = vrcp.pop 32.0
    %v535 = vmul.f32 32.0, %v534
    %v536 = vsub.f32 1.0, %v535
    %v537 = vmul.f32 %v534, %v536
    %v538 = vadd.f32 %v534, %v537
    %vm539 = vweird.f32 %v534
    %v540 = vsel %vm539, %v534, %v538
    %v541 = vmul.f32 %v530, %v540
    %v542 = vmul.f32 %v533, %v540
    %v543 = vsub.f32 %v526, %v541
    %v544 = vsub.f32 %v527, %v542
    %v545 = vmul.f32 %v543, %v543
    %v546 = vmul.f32 %v544, %v544
    %v547 = vsel %vm75, %v545, 0.0
    %548 = vadd.xlane.f32.xlu0 %v547
    %v549 = vpop.xlane.xlu0 %548
    %v550 = vsel %vm75, %v546, 0.0
    %551 = vadd.xlane.f32.xlu0 %v550
    %v552 = vpop.xlane.xlu0 %551
    %v553 = vmul.f32 %v549, %v540
    %v554 = vmul.f32 %v552, %v540
    %v555 = vadd.f32 %v553, 1e-05
    %v556 = vadd.f32 %v554, 1e-05
    %v557 = vrsqrt.pop %v555
    %v558 = vmul.f32 %v557, %v555
    %v559 = vmul.f32 %v558, %v557
    %v560 = vmul.f32 0.5, %v559
    %v561 = vsub.f32 1.5, %v560
    %v562 = vmul.f32 %v557, %v561
    %vm563 = vweird.f32 %v555
    %vm564 = vweird.f32 %v557
    %vm565 = vmor %vm563, %vm564
    %v566 = vsel %vm565, %v557, %v562
    %v567 = vrsqrt.pop %v556
    %v568 = vmul.f32 %v567, %v556
    %v569 = vmul.f32 %v568, %v567
    %v570 = vmul.f32 0.5, %v569
    %v571 = vsub.f32 1.5, %v570
    %v572 = vmul.f32 %v567, %v571
    %vm573 = vweird.f32 %v556
    %vm574 = vweird.f32 %v567
    %vm575 = vmor %vm573, %vm574
    %v576 = vsel %vm575, %v567, %v572
    %v577 = vmul.f32 %v543, %v566
    %v578 = vmul.f32 %v544, %v576
    %v579 = vperm.slane %v68, 0
    %v580 = vmul.f32 %v577, %v579
    %v581 = vmul.f32 %v578, %v579
    %v582 = vperm.slane %v69, 0
    %v583 = vadd.f32 %v580, %v582
    %v584 = vadd.f32 %v581, %v582
    %v585 = vperm.slane %v70, 0
    %v587 = vsel %vm75, %v583, 0
    %v590 = vsel %vm75, %v584, 0
    %592 = vmatpush.msra.mxu0 0.0
    %593 = vmatpush.msra.mxu0 0.0
    %594 = vmatpush.msra.mxu0 0.0
    %595 = vmatpush.msra.mxu0 0.0
    %596 = vmatpush.msra.mxu0 0.0
    %597 = vmatpush.msra.mxu0 0.0
    %598 = vmatpush.msra.mxu0 0.0
    %599 = vmatpush.msra.mxu0 0.0
    %600 = vmatpush.msra.mxu0 0.0
    %601 = vmatpush.msra.mxu0 0.0
    %602 = vmatpush.msra.mxu0 0.0
    %603 = vmatpush.msra.mxu0 0.0
    %604 = vmatpush.msra.mxu0 %v57
    %605 = vmatpush.msra.mxu0 %v56
    %606 = vmatpush.msra.mxu0 %v55
    %607 = vmatpush.msra.mxu0 %v54
    %608 = vmatmul.f32.gmra.mxu0 %v587
    %v609 = vpop.f32.mrf.mxu0
    %v610 = vadd.f32 %v585, %v609
    %611 = vmatmul.f32.gmra.mxu0 %v590
    %v612 = vpop.f32.mrf.mxu0
    %v613 = vadd.f32 %v585, %v612
    %614 = vdwg.mxu0
    %v615 = vmax.f32 %v610, 0.0
    %v616 = vmax.f32 %v613, 0.0
    %v617 = vperm.slane %v71, 0
    %v619 = vsel %vm286, %v615, 0
    %v622 = vsel %vm286, %v616, 0
    %624 = vmatpush.msra.mxu0 0.0
    %625 = vmatpush.msra.mxu0 0.0
    %626 = vmatpush.msra.mxu0 0.0
    %627 = vmatpush.msra.mxu0 0.0
    %628 = vmatpush.msra.mxu0 0.0
    %629 = vmatpush.msra.mxu0 0.0
    %630 = vmatpush.msra.mxu0 0.0
    %631 = vmatpush.msra.mxu0 0.0
    %632 = vmatpush.msra.mxu0 %v65
    %633 = vmatpush.msra.mxu0 %v64
    %634 = vmatpush.msra.mxu0 %v63
    %635 = vmatpush.msra.mxu0 %v62
    %636 = vmatpush.msra.mxu0 %v61
    %637 = vmatpush.msra.mxu0 %v60
    %638 = vmatpush.msra.mxu0 %v59
    %639 = vmatpush.msra.mxu0 %v58
    %640 = vmatmul.f32.gmra.mxu0 %v619
    %v641 = vpop.f32.mrf.mxu0
    %v642 = vadd.f32 %v617, %v641
    %643 = vmatmul.f32.gmra.mxu0 %v622
    %v644 = vpop.f32.mrf.mxu0
    %v645 = vadd.f32 %v617, %v644
    %646 = vdwg.mxu0
    %v647 = vadd.f32 %v583, %v642
    %v648 = vadd.f32 %v584, %v645
    %v649 = vsel %vm75, %v647, 0.0
    %650 = vadd.xlane.f32.xlu0 %v649
    %v651 = vpop.xlane.xlu0 %650
    %v652 = vsel %vm75, %v648, 0.0
    %653 = vadd.xlane.f32.xlu0 %v652
    %v654 = vpop.xlane.xlu0 %653
    %v655 = vmul.f32 %v651, %v540
    %v656 = vmul.f32 %v654, %v540
    %v657 = vsub.f32 %v647, %v655
    %v658 = vsub.f32 %v648, %v656
    %v659 = vmul.f32 %v657, %v657
    %v660 = vmul.f32 %v658, %v658
    %v661 = vsel %vm75, %v659, 0.0
    %662 = vadd.xlane.f32.xlu0 %v661
    %v663 = vpop.xlane.xlu0 %662
    %v664 = vsel %vm75, %v660, 0.0
    %665 = vadd.xlane.f32.xlu0 %v664
    %v666 = vpop.xlane.xlu0 %665
    %v667 = vmul.f32 %v663, %v540
    %v668 = vmul.f32 %v666, %v540
    %v669 = vadd.f32 %v667, 1e-05
    %v670 = vadd.f32 %v668, 1e-05
    %v671 = vrsqrt.pop %v669
    %v672 = vmul.f32 %v671, %v669
    %v673 = vmul.f32 %v672, %v671
    %v674 = vmul.f32 0.5, %v673
    %v675 = vsub.f32 1.5, %v674
    %v676 = vmul.f32 %v671, %v675
    %vm677 = vweird.f32 %v669
    %vm678 = vweird.f32 %v671
    %vm679 = vmor %vm677, %vm678
    %v680 = vsel %vm679, %v671, %v676
    %v681 = vrsqrt.pop %v670
    %v682 = vmul.f32 %v681, %v670
    %v683 = vmul.f32 %v682, %v681
    %v684 = vmul.f32 0.5, %v683
    %v685 = vsub.f32 1.5, %v684
    %v686 = vmul.f32 %v681, %v685
    %vm687 = vweird.f32 %v670
    %vm688 = vweird.f32 %v681
    %vm689 = vmor %vm687, %vm688
    %v690 = vsel %vm689, %v681, %v686
    %v691 = vmul.f32 %v657, %v680
    %v692 = vmul.f32 %v658, %v690
    %v693 = vperm.slane %v72, 0
    %v694 = vmul.f32 %v691, %v693
    %v695 = vmul.f32 %v692, %v693
    %v696 = vperm.slane %v73, 0
    %v697 = vadd.f32 %v694, %v696
    %v698 = vadd.f32 %v695, %v696
    %699 = vst.msk [vmem:[#allocation7] sm:$0xff] %vm75, %v697
    %700 = vst.msk [vmem:[#allocation7 + $0x8] sm:$0xff] %vm75, %v698
    // Predicated region
    $region18: #{tpu_custom_call.1} parent=1 // pred_check
      _
    $region19: #{tpu_custom_call.1} parent=1 // pred_check_branch
      %702 = sbr.rel (0) target = $region21
    $region20: #{tpu_custom_call.1} parent=1 // pred_region
      %704 = vsyncadd [#allocation4], 0
      %s705 = sshll.u32 [#allocation7], 4
      %s706 = int_to_ptr.vmem [resolvable:$true] %s705
      %s707 = sshll.u32 %s2, 4
      %s708 = int_to_ptr.hbm [resolvable:$true] %s707
      %713 = dma.vmem_to_hbm [thread:$0]  %s706, 256, %s708, [#allocation4], 128, 128, 8
    $region21: #{tpu_custom_call.1} parent=1 // pred_fallthru
      _
    // Predicated region
    $region22: #{tpu_custom_call.1} parent=1 // pred_check
      _
    $region23: #{tpu_custom_call.1} parent=1 // pred_check_branch
      %715 = sbr.rel (0) target = $region25
    $region24: #{tpu_custom_call.1} parent=1 // pred_region
      %717 = dma.done [#allocation4], 256
    $region25: #{tpu_custom_call.1} parent=1 // pred_fallthru
      _
    %718 = vsyncpa [#allocation3], 1
    %719 = vsyncpa [#allocation6], 1
    %720 = vsyncpa [#allocation4], 1

</llo_original>
